<compile_context>
chip_gen: v7x
topology: tpu7x:2x2x1
jax: 0.10.0
libtpu: 0.0.40
codegen_flags: <defaults>
</compile_context>

<pallas_src>
import functools

import jax
import jax.numpy as jnp
from jax.experimental import pallas as pl
from jax.experimental.pallas import tpu as pltpu


def _pow_no_transcendental(pt, gamma):
    """pt ** gamma as a VALU multiply chain when gamma is a small integer."""
    g = float(gamma)
    if g == 0.0:
        return jnp.ones_like(pt)
    if g.is_integer() and 0 < g <= 16:
        n = int(g)
        result = None
        base = pt
        while n:  # trace-time exponentiation-by-squaring (unrolled)
            if n & 1:
                result = base if result is None else result * base
            n >>= 1
            if n:
                base = base * base
        return result
    # TODO(synk): non-integer gamma falls back to the transcendental pow (log+exp on EUP).
    return jnp.power(pt, g)


def _focal_loss_kernel(logits_ref, target_ref, weights_ref, out_ref, *, alpha, gamma):
    # Lane-dense blocks: proposals on lanes, classes on sublanes, batch squeezed.
    x = logits_ref[...]          # (C, TP) float32
    t = target_ref[...]          # (C, TP) float32
    w = weights_ref[...]         # (1, TP) float32 -> broadcasts over class sublanes

    # Shared exp(-|x|) feeds both the numerically stable sigmoid and log1p,
    # so only exp + log1p remain as per-element transcendentals.
    e = jnp.exp(-jnp.abs(x))
    inv = pl.reciprocal(1.0 + e)                       # full precision (keeps 1e-5 tol)
    pred_sigmoid = jnp.where(x >= 0.0, inv, e * inv)   # stable sigmoid(x)

    # alpha balancing weight
    alpha_weight = t * alpha + (1.0 - t) * (1.0 - alpha)

    # pt = prob of the "other" outcome; pt**gamma via multiply chain (gamma=2 -> pt*pt)
    pt = t * (1.0 - pred_sigmoid) + (1.0 - t) * pred_sigmoid
    focal_weight = alpha_weight * _pow_no_transcendental(pt, gamma)

    # stable sigmoid cross-entropy with logits: max(x,0) - x*z + log(1 + exp(-|x|))
    bce_loss = jnp.maximum(x, 0.0) - x * t + jnp.log1p(e)

    out_ref[...] = focal_weight * bce_loss * w


def _choose_lane_tile(P, C, dtype_bytes=4, budget_bytes=8 * 1024 * 1024):
    """Largest lane tile (full P, or a multiple of 128 dividing P) within VMEM budget.

    Budget counts the three streamed (C, TP) tiles (logits, target, out),
    double-buffered, with the class axis padded to 8 sublanes.  8 MiB of
    streaming tiles stays comfortably inside the scoped-VMEM limit on
    v5e/v6e/v7x (v7x has only 64 MiB physical VMEM per TensorCore).
    """
    c_pad = max(8, ((C + 7) // 8) * 8)
    per_lane_bytes = 3 * 2 * c_pad * dtype_bytes
    max_tp = max(128, budget_bytes // per_lane_bytes)
    if P <= max_tp:
        return P                       # full-P lane dim is always a legal block
    tp = (min(max_tp, P) // 128) * 128
    while tp >= 128:
        if P % tp == 0:
            return tp
        tp -= 128
    return P                           # no 128-multiple divisor; fall back to full rows


def sigmoid_focal_classification_loss(logits, target, weights, *, gamma=2.0, alpha=0.25):
    """JAX/Pallas equivalent of SigmoidFocalClassificationLoss.forward.

    Args:
      logits:  (B, P, C) float32 predicted logits.
      target:  (B, P, C) float32 one-hot targets.
      weights: (B, P)    float32 anchor-wise weights.

    Returns:
      (B, P, C) float32 weighted focal loss (no reduction).
    """
    B, P, C = logits.shape
    assert target.shape == (B, P, C)
    assert weights.shape == (B, P)

    dtype = logits.dtype

    # Layout plumbing (wrapper only, no in-kernel transpose): proposals -> lanes.
    logits_t = jnp.transpose(logits, (0, 2, 1))                 # (B, C, P)
    target_t = jnp.transpose(target, (0, 2, 1)).astype(dtype)   # (B, C, P)
    weights_r = weights.reshape(B, 1, P).astype(dtype)          # (B, 1, P) lane-dense row

    tp = _choose_lane_tile(P, C)
    grid = (B, P // tp)

    kernel = functools.partial(_focal_loss_kernel, alpha=float(alpha), gamma=float(gamma))

    out_t = pl.pallas_call(
        kernel,
        out_shape=jax.ShapeDtypeStruct((B, C, P), dtype),
        grid=grid,
        in_specs=[
            pl.BlockSpec((pl.Squeezed(), C, tp), lambda b, p: (b, 0, p)),
            pl.BlockSpec((pl.Squeezed(), C, tp), lambda b, p: (b, 0, p)),
            pl.BlockSpec((pl.Squeezed(), 1, tp), lambda b, p: (b, 0, p)),
        ],
        out_specs=pl.BlockSpec((pl.Squeezed(), C, tp), lambda b, p: (b, 0, p)),
        compiler_params=pltpu.CompilerParams(
            dimension_semantics=("parallel", "parallel"),
            vmem_limit_bytes=32 * 1024 * 1024,
        ),
    )(logits_t, target_t, weights_r)

    return jnp.transpose(out_t, (0, 2, 1))                      # back to (B, P, C)


def _reference(logits, target, weights, gamma=2.0, alpha=0.25):
    pred_sigmoid = jax.nn.sigmoid(logits)
    alpha_weight = target * alpha + (1.0 - target) * (1.0 - alpha)
    pt = target * (1.0 - pred_sigmoid) + (1.0 - target) * pred_sigmoid
    focal_weight = alpha_weight * jnp.power(pt, gamma)
    bce = jnp.maximum(logits, 0.0) - logits * target + jnp.log1p(jnp.exp(-jnp.abs(logits)))
    return focal_weight * bce * weights[..., None]


if __name__ == "__main__":
    # SigmoidFocalClassificationLoss has no learnable parameters (only gamma/alpha
    # scalars), so there is nothing to initialize beyond the hyperparameters.
    B, P, C = 2, 256, 4  # batch, #proposals, #classes (P is a multiple of 128 -> dense lanes)

    key = jax.random.PRNGKey(0)
    k1, k2, k3 = jax.random.split(key, 3)

    logits = jax.random.normal(k1, (B, P, C), dtype=jnp.float32)
    labels = jax.random.randint(k2, (B, P), 0, C)
    target = jax.nn.one_hot(labels, C, dtype=jnp.float32)
    weights = jax.random.uniform(k3, (B, P), dtype=jnp.float32)

    out = sigmoid_focal_classification_loss(logits, target, weights, gamma=2.0, alpha=0.25)
    out = jax.block_until_ready(out)

    ref = _reference(logits, target, weights)
    assert out.shape == (B, P, C)
    assert jnp.allclose(out, ref, atol=1e-5, rtol=1e-5), "mismatch vs reference"

    print("KERNEL_OK")
</pallas_src>

<mosaic_0001>
module attributes {stable_mosaic.version = 11 : i64} {
  func.func @_focal_loss_kernel(%arg0: i32, %arg1: i32, %arg2: memref<1x4x256xf32, #tpu.memory_space<vmem>>, %arg3: memref<1x4x256xf32, #tpu.memory_space<vmem>>, %arg4: memref<1x1x256xf32, #tpu.memory_space<vmem>>, %arg5: memref<1x4x256xf32, #tpu.memory_space<vmem>>) attributes {dimension_semantics = [#tpu.dimension_semantics<parallel>, #tpu.dimension_semantics<parallel>], iteration_bounds = array<i64: 2, 1>, scalar_prefetch = 0 : i64, scratch_operands = 0 : i64, tpu.core_type = #tpu.core_type<tc>, window_params = [{transform_indices = @transform_0, window_bounds = array<i64: 1, 4, 256>}, {transform_indices = @transform_1, window_bounds = array<i64: 1, 4, 256>}, {transform_indices = @transform_2, window_bounds = array<i64: 1, 1, 256>}, {transform_indices = @transform_3, window_bounds = array<i64: 1, 4, 256>}]} {
    %c0 = arith.constant 0 : index
    %c0_0 = arith.constant 0 : index
    %c0_1 = arith.constant 0 : index
    %0 = vector.load %arg2[%c0, %c0_0, %c0_1] : memref<1x4x256xf32, #tpu.memory_space<vmem>>, vector<1x4x256xf32>
    %1 = vector.shape_cast %0 : vector<1x4x256xf32> to vector<4x256xf32>
    %c0_2 = arith.constant 0 : index
    %c0_3 = arith.constant 0 : index
    %c0_4 = arith.constant 0 : index
    %2 = vector.load %arg3[%c0_2, %c0_3, %c0_4] : memref<1x4x256xf32, #tpu.memory_space<vmem>>, vector<1x4x256xf32>
    %3 = vector.shape_cast %2 : vector<1x4x256xf32> to vector<4x256xf32>
    %c0_5 = arith.constant 0 : index
    %c0_6 = arith.constant 0 : index
    %c0_7 = arith.constant 0 : index
    %4 = vector.load %arg4[%c0_5, %c0_6, %c0_7] : memref<1x1x256xf32, #tpu.memory_space<vmem>>, vector<1x1x256xf32>
    %5 = vector.shape_cast %4 : vector<1x1x256xf32> to vector<1x256xf32>
    %6 = math.absf %1 : vector<4x256xf32>
    %cst = arith.constant 0.000000e+00 : f32
    %7 = vector.broadcast %cst : f32 to vector<4x256xf32>
    %8 = arith.subf %7, %6 : vector<4x256xf32>
    %9 = math.exp %8 : vector<4x256xf32>
    %cst_8 = arith.constant 1.000000e+00 : f32
    %10 = vector.broadcast %cst_8 : f32 to vector<4x256xf32>
    %11 = arith.addf %10, %9 : vector<4x256xf32>
    %12 = tpu.reciprocal %11 : vector<4x256xf32> -> vector<4x256xf32>
    %cst_9 = arith.constant 0.000000e+00 : f32
    %13 = vector.broadcast %cst_9 : f32 to vector<4x256xf32>
    %14 = arith.cmpf oge, %1, %13 : vector<4x256xf32>
    %15 = arith.mulf %9, %12 : vector<4x256xf32>
    %16 = arith.select %14, %12, %15 : vector<4x256xi1>, vector<4x256xf32>
    %cst_10 = arith.constant 2.500000e-01 : f32
    %17 = vector.broadcast %cst_10 : f32 to vector<4x256xf32>
    %18 = arith.mulf %3, %17 : vector<4x256xf32>
    %cst_11 = arith.constant 1.000000e+00 : f32
    %19 = vector.broadcast %cst_11 : f32 to vector<4x256xf32>
    %20 = arith.subf %19, %3 : vector<4x256xf32>
    %cst_12 = arith.constant 7.500000e-01 : f32
    %21 = vector.broadcast %cst_12 : f32 to vector<4x256xf32>
    %22 = arith.mulf %20, %21 : vector<4x256xf32>
    %23 = arith.addf %18, %22 : vector<4x256xf32>
    %cst_13 = arith.constant 1.000000e+00 : f32
    %24 = vector.broadcast %cst_13 : f32 to vector<4x256xf32>
    %25 = arith.subf %24, %16 : vector<4x256xf32>
    %26 = arith.mulf %3, %25 : vector<4x256xf32>
    %cst_14 = arith.constant 1.000000e+00 : f32
    %27 = vector.broadcast %cst_14 : f32 to vector<4x256xf32>
    %28 = arith.subf %27, %3 : vector<4x256xf32>
    %29 = arith.mulf %28, %16 : vector<4x256xf32>
    %30 = arith.addf %26, %29 : vector<4x256xf32>
    %31 = arith.mulf %30, %30 : vector<4x256xf32>
    %32 = arith.mulf %23, %31 : vector<4x256xf32>
    %cst_15 = arith.constant 0.000000e+00 : f32
    %33 = vector.broadcast %cst_15 : f32 to vector<4x256xf32>
    %34 = arith.maximumf %1, %33 : vector<4x256xf32>
    %35 = arith.mulf %1, %3 : vector<4x256xf32>
    %36 = arith.subf %34, %35 : vector<4x256xf32>
    %37 = math.log1p %9 : vector<4x256xf32>
    %38 = arith.addf %36, %37 : vector<4x256xf32>
    %39 = arith.mulf %32, %38 : vector<4x256xf32>
    %40 = vector.broadcast %5 : vector<1x256xf32> to vector<4x256xf32>
    %41 = arith.mulf %39, %40 : vector<4x256xf32>
    %c0_16 = arith.constant 0 : index
    %c0_17 = arith.constant 0 : index
    %c0_18 = arith.constant 0 : index
    %42 = vector.load %arg5[%c0_16, %c0_17, %c0_18] : memref<1x4x256xf32, #tpu.memory_space<vmem>>, vector<1x4x256xf32>
    %43 = vector.shape_cast %42 : vector<1x4x256xf32> to vector<4x256xf32>
    %44 = vector.shape_cast %41 : vector<4x256xf32> to vector<1x4x256xf32>
    tpu.vector_store %arg5[%c0_16, %c0_17, %c0_18], %44 {strides = array<i32>} : memref<1x4x256xf32, #tpu.memory_space<vmem>>, vector<1x4x256xf32>,
    return
  }
  func.func @transform_0(%arg0: i32, %arg1: i32) -> (i32, i32, i32) {
    %c0_i32 = arith.constant 0 : i32
    %c0_i32_0 = arith.constant 0 : i32
    return %arg0, %c0_i32, %arg1 : i32, i32, i32
  }
  func.func @transform_1(%arg0: i32, %arg1: i32) -> (i32, i32, i32) {
    %c0_i32 = arith.constant 0 : i32
    %c0_i32_0 = arith.constant 0 : i32
    return %arg0, %c0_i32, %arg1 : i32, i32, i32
  }
  func.func @transform_2(%arg0: i32, %arg1: i32) -> (i32, i32, i32) {
    %c0_i32 = arith.constant 0 : i32
    %c0_i32_0 = arith.constant 0 : i32
    return %arg0, %c0_i32, %arg1 : i32, i32, i32
  }
  func.func @transform_3(%arg0: i32, %arg1: i32) -> (i32, i32, i32) {
    %c0_i32 = arith.constant 0 : i32
    %c0_i32_0 = arith.constant 0 : i32
    return %arg0, %c0_i32, %arg1 : i32, i32, i32
  }
}

</mosaic_0001>

<llo_original>
// kernel: tpu_custom_call.1
$region0: #{tpu_custom_call.1}
  #allocation0 [shape = 'u32[]', space=smem, size = 0x4, offset = 0x4, fixed_abs, tag = 'smem constant byte address 0x4 - core index']
  #allocation1 [shape = 'u32[144,128]{1,0:T(1,128)}', space=vmem, size = 0x12000, scoped, tag = 'internal scratch']
  %s0 = inlined_call_operand.hbm [shape: f32[2,4,256], index: 0, kind: input, shape index: {}]
  %s1 = inlined_call_operand.hbm [shape: f32[2,4,256], index: 1, kind: input, shape index: {}]
  %s2 = inlined_call_operand.vmem [shape: f32[2,1,256], index: 2, kind: input, shape index: {}]
  %s3 = inlined_call_operand.hbm [shape: f32[2,4,256], index: 3, kind: output, shape index: {}]
  %s4 = sld [smem:[#allocation0]]
  $region53: #{tpu_custom_call.1} parent=0
    _
  %s6 = ssub.s32 1, %s4
  %s7 = scalar_select 0, %s6, %s4
  $region1: #{tpu_custom_call.1} parent=0
    #allocation2 [shape = 'u8[8192]{0}', space=vmem, size = 0x2000, scoped, tag = 'input window, operand 0']
    #allocation3 [shape = 's32[2]{0}', space=sflag, size = 0x8, scoped, tag = 'scoped memory for tpu_custom_call.1']
    #allocation4 [shape = 's32[2]{0}', space=sflag, size = 0x8, scoped, tag = 'scoped memory for tpu_custom_call.1']
    #allocation5 [shape = 'u8[8192]{0}', space=vmem, size = 0x2000, scoped, tag = 'input window, operand 1']
    #allocation6 [shape = 's32[2]{0}', space=sflag, size = 0x8, scoped, tag = 'scoped memory for tpu_custom_call.1']
    #allocation7 [shape = 'u8[8192]{0}', space=vmem, size = 0x2000, scoped, tag = 'output window, operand 0']
    %8 = vsyncpa [#allocation3], 0
    %s9 = scalar_lea.sflag [#allocation3], 1
    %10 = vsyncpa %s9, 0
    %11 = vsyncpa [#allocation6], 0
    %s12 = scalar_lea.sflag [#allocation6], 1
    %13 = vsyncpa %s12, 0
    %14 = vsyncpa [#allocation4], 0
    %s15 = scalar_lea.sflag [#allocation4], 1
    %16 = vsyncpa %s15, 0
    loop: start=0, step=1, limit=4
    $region2: #{tpu_custom_call.1} parent=1 // loop_pre_header
      _
    $region3: #{tpu_custom_call.1} parent=1 // loop_header
      %s18 = sphi 0, %s22
      %p19 = scmp.ge.s32.totalorder %s18, 4
      %s25 = sphi 0, %s37
      %s26 = sphi 0, %s33
      %s27 = sphi 0, %s25
      %s28 = sphi 0, %s26
      %s29 = sphi 0, %s27
      %s30 = sphi 0, %s28
      %s42 = sphi 0, %s44
      %s45 = sphi 0, %s42
      %s46 = sphi 0, %s45
      %s62 = sphi 0, %s46
      %s70 = sphi 0, %s72
      %s73 = sphi 0, %s70
      %s74 = sphi 0, %s73
      %s90 = sphi 0, %s74
      %s98 = sphi 0, %s100
      %s101 = sphi 0, %s98
      %s102 = sphi 0, %s101
      %s118 = sphi 0, %s102
      %s126 = sphi 0, %s128
      %s129 = sphi 0, %s126
      %s130 = sphi 0, %s129
      %s146 = sphi 0, %s130
    $region4: #{tpu_custom_call.1} parent=1 // loop_header_branch
      %21 = sbr.rel (%p19) target = $region8
    $region5: #{tpu_custom_call.1} parent=1 // loop_body
      %s23 = ssub.s32 %s18, 1
      %s24 = ssub.s32 %s18, 2
      %s31 = sadd.s32 1, %s26
      %p32 = scmp.ge.s32.totalorder %s31, 1
      %s33 = scalar_select %p32, 0, %s31
      %s34 = sadd.s32 1, %s25
      %s35 = scalar_select %p32, %s34, %s25
      %p36 = scmp.ge.s32.totalorder %s35, 2
      %s37 = scalar_select %p36, 0, %s35
      %s38 = ssub.s32 %s25, %s37
      %s39 = ssub.s32 %s26, %s33
      %s40 = sor.u32 %s38, %s39
      %p41 = scmp.eq.s32.totalorder %s40, 0
      %s43 = sadd.s32 %s42, 1
      %s44 = scalar_select %p41, %s42, %s43
      %p47 = pneg %p41
      %p48 = scmp.eq.s32.totalorder %s18, 1
      %p49 = por %p47, %p48
      %p50 = scmp.ne.s32.totalorder %s42, %s45
      %p51 = scmp.eq.s32.totalorder %s18, 0
      %p52 = por %p50, %p51
      %p53 = scmp.ne.s32.totalorder %s42, %s45
      %p54 = scmp.eq.s32.totalorder %s23, 1
      %p55 = por %p53, %p54
      %p56 = scmp.ne.s32.totalorder %s45, %s46
      %p57 = scmp.eq.s32.totalorder %s23, 0
      %p58 = por %p56, %p57
      %p59 = scmp.ne.s32.totalorder %s45, %s46
      %p60 = scmp.eq.s32.totalorder %s24, 1
      %p61 = por %p59, %p60
      %p63 = scmp.ne.s32.totalorder %s46, %s62
      %p64 = scmp.eq.s32.totalorder %s24, 0
      %p65 = por %p63, %p64
      %s66 = ssub.s32 %s25, %s37
      %s67 = ssub.s32 %s26, %s33
      %s68 = sor.u32 %s66, %s67
      %p69 = scmp.eq.s32.totalorder %s68, 0
      %s71 = sadd.s32 %s70, 1
      %s72 = scalar_select %p69, %s70, %s71
      %p75 = pneg %p69
      %p76 = scmp.eq.s32.totalorder %s18, 1
      %p77 = por %p75, %p76
      %p78 = scmp.ne.s32.totalorder %s70, %s73
      %p79 = scmp.eq.s32.totalorder %s18, 0
      %p80 = por %p78, %p79
      %p81 = scmp.ne.s32.totalorder %s70, %s73
      %p82 = scmp.eq.s32.totalorder %s23, 1
      %p83 = por %p81, %p82
      %p84 = scmp.ne.s32.totalorder %s73, %s74
      %p85 = scmp.eq.s32.totalorder %s23, 0
      %p86 = por %p84, %p85
      %p87 = scmp.ne.s32.totalorder %s73, %s74
      %p88 = scmp.eq.s32.totalorder %s24, 1
      %p89 = por %p87, %p88
      %p91 = scmp.ne.s32.totalorder %s74, %s90
      %p92 = scmp.eq.s32.totalorder %s24, 0
      %p93 = por %p91, %p92
      %s94 = ssub.s32 %s25, %s37
      %s95 = ssub.s32 %s26, %s33
      %s96 = sor.u32 %s94, %s95
      %p97 = scmp.eq.s32.totalorder %s96, 0
      %s99 = sadd.s32 %s98, 1
      %s100 = scalar_select %p97, %s98, %s99
      %p103 = pneg %p97
      %p104 = scmp.eq.s32.totalorder %s18, 1
      %p105 = por %p103, %p104
      %p106 = scmp.ne.s32.totalorder %s98, %s101
      %p107 = scmp.eq.s32.totalorder %s18, 0
      %p108 = por %p106, %p107
      %p109 = scmp.ne.s32.totalorder %s98, %s101
      %p110 = scmp.eq.s32.totalorder %s23, 1
      %p111 = por %p109, %p110
      %p112 = scmp.ne.s32.totalorder %s101, %s102
      %p113 = scmp.eq.s32.totalorder %s23, 0
      %p114 = por %p112, %p113
      %p115 = scmp.ne.s32.totalorder %s101, %s102
      %p116 = scmp.eq.s32.totalorder %s24, 1
      %p117 = por %p115, %p116
      %p119 = scmp.ne.s32.totalorder %s102, %s118
      %p120 = scmp.eq.s32.totalorder %s24, 0
      %p121 = por %p119, %p120
      %s122 = ssub.s32 %s25, %s37
      %s123 = ssub.s32 %s26, %s33
      %s124 = sor.u32 %s122, %s123
      %p125 = scmp.eq.s32.totalorder %s124, 0
      %s127 = sadd.s32 %s126, 1
      %s128 = scalar_select %p125, %s126, %s127
      %p131 = pneg %p125
      %p132 = scmp.eq.s32.totalorder %s18, 1
      %p133 = por %p131, %p132
      %p134 = scmp.ne.s32.totalorder %s126, %s129
      %p135 = scmp.eq.s32.totalorder %s18, 0
      %p136 = por %p134, %p135
      %p137 = scmp.ne.s32.totalorder %s126, %s129
      %p138 = scmp.eq.s32.totalorder %s23, 1
      %p139 = por %p137, %p138
      %p140 = scmp.ne.s32.totalorder %s129, %s130
      %p141 = scmp.eq.s32.totalorder %s23, 0
      %p142 = por %p140, %p141
      %p143 = scmp.ne.s32.totalorder %s129, %s130
      %p144 = scmp.eq.s32.totalorder %s24, 1
      %p145 = por %p143, %p144
      %p147 = scmp.ne.s32.totalorder %s130, %s146
      %p148 = scmp.eq.s32.totalorder %s24, 0
      %p149 = por %p147, %p148
      %p150 = scmp.le.s32.totalorder 1, %s18
      %p151 = scmp.lt.s32.totalorder %s18, 3
      %p152 = pnand %p150, %p151
      %p153 = pneg %p152
      // Predicated region
      $region9: #{tpu_custom_call.1} parent=5 // pred_check
        _
      $region10: #{tpu_custom_call.1} parent=5 // pred_check_branch
        %155 = sbr.rel (%p152) target = $region12
      $region11: #{tpu_custom_call.1} parent=5 // pred_region
        %s156 = ssub.s32 %s18, 1
      $region12: #{tpu_custom_call.1} parent=5 // pred_fallthru
        _
      %p157 = scmp.lt.s32.totalorder %s18, 2
      // Predicated region
      $region13: #{tpu_custom_call.1} parent=5 // pred_check
        %p158 = pneg %p157
      $region14: #{tpu_custom_call.1} parent=5 // pred_check_branch
        %160 = sbr.rel (%p158) target = $region16
      $region15: #{tpu_custom_call.1} parent=5 // pred_region
        // Predicated region
        $region17: #{tpu_custom_call.1} parent=15 // pred_check
          %p161 = pneg %p52
        $region18: #{tpu_custom_call.1} parent=15 // pred_check_branch
          %163 = sbr.rel (%p161) target = $region20
        $region19: #{tpu_custom_call.1} parent=15 // pred_region
          %s164 = sand.u32 %s42, 1
          %s165 = scalar_lea.sflag [#allocation3], %s164
          %s166 = sand.u32 %s42, 1
          %s167 = smul.addr %s166, 8
          %s168 = scalar_lea.vmem [#allocation2], %s167
          %s169 = smul.u32 2, %s26
          %s171 = ssub.s32 128, 128
          %172 = vsyncadd %s165, %s171
          %s173 = smul.addr %s25, 2
          %s174 = sadd.s32 %s169, %s173
          %s175 = smul.addr %s174, 64
          %s176 = scalar_lea.hbm %s0, %s175
          %s178 = sshll.u32 %s168, 4
          %s179 = int_to_ptr.vmem [resolvable:$true] %s178
          %181 = dma.hbm_to_vmem [thread:$0]  %s176, 128, %s179, %s165
        $region20: #{tpu_custom_call.1} parent=15 // pred_fallthru
          _
        // Predicated region
        $region21: #{tpu_custom_call.1} parent=15 // pred_check
          %p182 = pneg %p80
        $region22: #{tpu_custom_call.1} parent=15 // pred_check_branch
          %184 = sbr.rel (%p182) target = $region24
        $region23: #{tpu_custom_call.1} parent=15 // pred_region
          %s185 = sand.u32 %s70, 1
          %s186 = scalar_lea.sflag [#allocation6], %s185
          %s187 = sand.u32 %s70, 1
          %s188 = smul.addr %s187, 8
          %s189 = scalar_lea.vmem [#allocation5], %s188
          %s190 = smul.u32 2, %s26
          %s192 = ssub.s32 128, 128
          %193 = vsyncadd %s186, %s192
          %s194 = smul.addr %s25, 2
          %s195 = sadd.s32 %s190, %s194
          %s196 = smul.addr %s195, 64
          %s197 = scalar_lea.hbm %s1, %s196
          %s199 = sshll.u32 %s189, 4
          %s200 = int_to_ptr.vmem [resolvable:$true] %s199
          %202 = dma.hbm_to_vmem [thread:$0]  %s197, 128, %s200, %s186
        $region24: #{tpu_custom_call.1} parent=15 // pred_fallthru
          _
        // Predicated region
        $region25: #{tpu_custom_call.1} parent=15 // pred_check
          %p203 = pneg %p108
        $region26: #{tpu_custom_call.1} parent=15 // pred_check_branch
          %205 = sbr.rel (%p203) target = $region28
        $region27: #{tpu_custom_call.1} parent=15 // pred_region
          %s206 = smul.u32 2, %s26
          %p207 = scmp.lt.s32.totalorder %s25, 1
          %s208 = scalar_select %p207, %s25, 1
          %p209 = scmp.lt.s32.totalorder %s206, 1
          %s210 = scalar_select %p209, %s206, 1
          %s211 = smul.addr %s208, 2
          %s212 = sadd.s32 %s210, %s211
          %s213 = scalar_lea.vmem %s2, %s212
          %s214 = smul.u32 2, %s26
        $region28: #{tpu_custom_call.1} parent=15 // pred_fallthru
          _
      $region16: #{tpu_custom_call.1} parent=5 // pred_fallthru
        _
      %p215 = scmp.le.s32.totalorder 1, %s18
      %p216 = scmp.lt.s32.totalorder %s18, 3
      %p217 = pnand %p215, %p216
      %p218 = pneg %p217
      // Predicated region
      $region29: #{tpu_custom_call.1} parent=5 // pred_check
        _
      $region30: #{tpu_custom_call.1} parent=5 // pred_check_branch
        %220 = sbr.rel (%p217) target = $region32
      $region31: #{tpu_custom_call.1} parent=5 // pred_region
        %s221 = ssub.s32 %s18, 1
        %s222 = sand.u32 %s45, 1
        %s223 = scalar_lea.sflag [#allocation3], %s222
        %s224 = sand.u32 %s45, 1
        %s225 = smul.addr %s224, 8
        %s226 = scalar_lea.vmem [#allocation2], %s225
        // Predicated region
        $region33: #{tpu_custom_call.1} parent=31 // pred_check
          %p227 = pneg %p58
        $region34: #{tpu_custom_call.1} parent=31 // pred_check_branch
          %229 = sbr.rel (%p227) target = $region36
        $region35: #{tpu_custom_call.1} parent=31 // pred_region
          %230 = dma.done %s223, 128
        $region36: #{tpu_custom_call.1} parent=31 // pred_fallthru
          _
        %s231 = sand.u32 %s73, 1
        %s232 = scalar_lea.sflag [#allocation6], %s231
        %s233 = sand.u32 %s73, 1
        %s234 = smul.addr %s233, 8
        %s235 = scalar_lea.vmem [#allocation5], %s234
        // Predicated region
        $region37: #{tpu_custom_call.1} parent=31 // pred_check
          %p236 = pneg %p86
        $region38: #{tpu_custom_call.1} parent=31 // pred_check_branch
          %238 = sbr.rel (%p236) target = $region40
        $region39: #{tpu_custom_call.1} parent=31 // pred_region
          %239 = dma.done %s232, 128
        $region40: #{tpu_custom_call.1} parent=31 // pred_fallthru
          _
        %s240 = sand.u32 %s45, 1
        %s241 = scalar_lea.sflag [#allocation3], %s240
        %s242 = sand.u32 %s45, 1
        %s243 = smul.addr %s242, 8
        %s244 = scalar_lea.vmem [#allocation2], %s243
        %p245 = pneg %p58
        %p246 = pneg %p55
        %s247 = sand.u32 %s73, 1
        %s248 = scalar_lea.sflag [#allocation6], %s247
        %s249 = sand.u32 %s73, 1
        %s250 = smul.addr %s249, 8
        %s251 = scalar_lea.vmem [#allocation5], %s250
        %p252 = pneg %p86
        %p253 = pneg %p83
        %s254 = smul.u32 2, %s28
        %p255 = scmp.lt.s32.totalorder %s27, 1
        %s256 = scalar_select %p255, %s27, 1
        %p257 = scmp.lt.s32.totalorder %s254, 1
        %s258 = scalar_select %p257, %s254, 1
        %s259 = smul.addr %s256, 2
        %s260 = sadd.s32 %s258, %s259
        %s261 = scalar_lea.vmem %s2, %s260
        %p262 = pneg %p114
        %p263 = pneg %p111
        %p264 = pneg %p142
        %p265 = pneg %p139
        %s266 = sand.u32 %s129, 1
        %s267 = scalar_lea.sflag [#allocation4], %s266
        %s268 = sand.u32 %s129, 1
        %s269 = smul.addr %s268, 8
        %s270 = scalar_lea.vmem [#allocation7], %s269
        %s271 = smul.u32 2, %s28
        %s272 = smul.u32 2, %s28
        %s273 = smul.u32 2, %s28
        %p274 = scmp.lt.s32.totalorder %s27, 1
        %s275 = scalar_select %p274, %s27, 1
        %p276 = scmp.lt.s32.totalorder %s273, 1
        %s277 = scalar_select %p276, %s273, 1
        %s278 = smul.addr %s275, 2
        %s279 = sadd.s32 %s277, %s278
        %s280 = scalar_lea.vmem %s2, %s279
        %s281 = smul.u32 2, %s28
        %s282 = smul.u32 2, %s28
        %v283 = vld [vmem:[%s226] sm:$0xff]
        %v284 = vld [vmem:[%s235] sm:$0xff]
        %v285 = vld [vmem:[%s280] sm:$0x3]
        %v286 = vand.u32 2147483647, %v283
        %v287 = vsub.f32 0.0, %v286
        %v288 = vmul.f32 %v287, 1.442695
        %v289 = vpow.pop %v288
        %v290 = vadd.f32 %v289, 1.0
        %v291 = vrcp.pop %v290
        %vm292 = vcmp.ge.f32.partialorder %v283, 0.0
        %v293 = vmul.f32 %v289, %v291
        %v294 = vsel %vm292, %v291, %v293
        %v295 = vmul.f32 %v284, 0.25
        %v296 = vsub.f32 1.0, %v284
        %v297 = vmul.f32 %v296, 0.75
        %v298 = vadd.f32 %v295, %v297
        %v299 = vsub.f32 1.0, %v294
        %v300 = vmul.f32 %v284, %v299
        %v301 = vmul.f32 %v296, %v294
        %v302 = vadd.f32 %v300, %v301
        %v303 = vmul.f32 %v302, %v302
        %v304 = vmul.f32 %v298, %v303
        %v305 = vmax.f32 %v283, 0.0
        %v306 = vmul.f32 %v283, %v284
        %v307 = vsub.f32 %v305, %v306
        %v308 = vadd.f32 %v289, 1.0
        %v309 = vlog2.pop %v308
        %v310 = vmul.f32 %v309, 0.6931472
        %v311 = vmul.f32 -0.5, %v289
        %v312 = vadd.f32 %v311, 1.0
        %v313 = vmul.f32 %v312, %v289
        %v314 = vand.u32 2147483647, %v289
        %vm315 = vcmp.lt.f32.partialorder %v314, 0.0004427343
        %v316 = vsel %vm315, %v313, %v310
        %v317 = vadd.f32 %v307, %v316
        %v318 = vmul.f32 %v304, %v317
        %v320 = vlaneseq
        %v321 = vshrl.u32 %v320, 7
        %v322 = vsub.s32 0, %v321
        %v323 = vrot.slane %v285, %v322
        %v324 = vlaneseq
        %v325 = vshrl.u32 %v324, 7
        %v326 = vsub.s32 1, %v325
        %v327 = vrot.slane %v285, %v326
        %v328 = vcombine.low %v323, %v327
        %v330 = vmul.f32 %v318, %v328
        %331 = vst [vmem:[%s270] sm:$0xff] %v330
        %s332 = sand.u32 %s129, 1
        %s333 = scalar_lea.sflag [#allocation4], %s332
        %s334 = sand.u32 %s129, 1
        %s335 = smul.addr %s334, 8
        %s336 = scalar_lea.vmem [#allocation7], %s335
        // Predicated region
        $region41: #{tpu_custom_call.1} parent=31 // pred_check
          %p337 = pneg %p139
        $region42: #{tpu_custom_call.1} parent=31 // pred_check_branch
          %339 = sbr.rel (%p337) target = $region44
        $region43: #{tpu_custom_call.1} parent=31 // pred_region
          %s340 = smul.u32 2, %s28
          %s342 = ssub.s32 128, 128
          %343 = vsyncadd %s333, %s342
          %s344 = smul.addr %s27, 2
          %s345 = sadd.s32 %s340, %s344
          %s346 = smul.addr %s345, 64
          %s347 = scalar_lea.hbm %s3, %s346
          %s349 = sshll.u32 %s336, 4
          %s350 = int_to_ptr.vmem [resolvable:$true] %s349
          %352 = dma.vmem_to_hbm [thread:$0]  %s350, 128, %s347, %s333
        $region44: #{tpu_custom_call.1} parent=31 // pred_fallthru
          _
      $region32: #{tpu_custom_call.1} parent=5 // pred_fallthru
        _
      %p353 = scmp.le.s32.totalorder 2, %s18
      // Predicated region
      $region45: #{tpu_custom_call.1} parent=5 // pred_check
        %p354 = pneg %p353
      $region46: #{tpu_custom_call.1} parent=5 // pred_check_branch
        %356 = sbr.rel (%p354) target = $region48
      $region47: #{tpu_custom_call.1} parent=5 // pred_region
        %s357 = ssub.s32 %s18, 2
        // Predicated region
        $region49: #{tpu_custom_call.1} parent=47 // pred_check
          %p358 = pneg %p145
        $region50: #{tpu_custom_call.1} parent=47 // pred_check_branch
          %360 = sbr.rel (%p358) target = $region52
        $region51: #{tpu_custom_call.1} parent=47 // pred_region
          %s361 = sand.u32 %s130, 1
          %s362 = scalar_lea.sflag [#allocation4], %s361
          %s363 = sand.u32 %s130, 1
          %s364 = smul.addr %s363, 8
          %s365 = scalar_lea.vmem [#allocation7], %s364
          %366 = dma.done %s362, 128
        $region52: #{tpu_custom_call.1} parent=47 // pred_fallthru
          _
      $region48: #{tpu_custom_call.1} parent=5 // pred_fallthru
        _
    $region6: #{tpu_custom_call.1} parent=1 // loop_footer
      %s22 = sadd.s32 1, %s18
    $region7: #{tpu_custom_call.1} parent=1 // loop_footer_branch
      %17 = sbr.rel target = $region3
    $region8: #{tpu_custom_call.1} parent=1 // loop_exit
      _
    %367 = vsyncpa [#allocation3], 1
    %s368 = scalar_lea.sflag [#allocation3], 1
    %369 = vsyncpa %s368, 1
    %370 = vsyncpa [#allocation6], 1
    %s371 = scalar_lea.sflag [#allocation6], 1
    %372 = vsyncpa %s371, 1
    %373 = vsyncpa [#allocation4], 1
    %s374 = scalar_lea.sflag [#allocation4], 1
    %375 = vsyncpa %s374, 1

</llo_original>
